<compile_context>
chip_gen: v5e
topology: v5e:2x2
jax: 0.10.0
libtpu: 0.0.40
codegen_flags: <defaults>
</compile_context>

<pallas_src>
import functools

import jax
import jax.numpy as jnp
from jax.experimental import pallas as pl
from jax.experimental.pallas import tpu as pltpu


def rbf_flatten_kernel(y_ref, mean_ref, neg_temp_ref, o_ref):
    """One grid step: (TM, 1) pre-affined distances -> (TM, K) RBF features.

    y_ref:        (TM, 1) f32   y = mul * x + bias (precomputed in wrapper)
    mean_ref:     (1, K)  f32   means table row 0 (resident across grid)
    neg_temp_ref: (1, K)  f32   -|temps table row 0| (resident across grid)
    o_ref:        (TM, K)       output block (lane-dense, K on lanes)
    """
    d = y_ref[...] - mean_ref[...]                        # (TM, K) broadcast
    o_ref[...] = jnp.exp(d * d * neg_temp_ref[...]).astype(o_ref.dtype)


@functools.partial(jax.jit, static_argnames=("tm_max",))
def rbf_flatten(x, edge_types, t, means_w, temps_w, mul_w, bias_w, *, tm_max=2048):
    """Pallas wrapper. x, edge_types: (B, N, N); t: (B, 1, 1). Returns (B, N, N, K)."""
    B, N1, N2 = x.shape
    M = B * N1 * N2
    K = means_w.shape[1]
    out_dtype = means_w.dtype

    # --- Hoisted embedding gathers + affine (plain XLA; tiny vs. K*4 B/pos output) ---
    et_flat = edge_types.reshape(M).astype(jnp.int32)
    mul = mul_w[et_flat, 0].astype(jnp.float32)                      # (M,)
    bias = bias_w[et_flat, 0].astype(jnp.float32)                    # (M,)
    y = (mul * x.reshape(M).astype(jnp.float32) + bias).reshape(M, 1)

    # torch.zeros_like(t) always selects row 0 of means/temps; fold abs + negate.
    mean = means_w[0:1].astype(jnp.float32)                          # (1, K)
    neg_temp = -jnp.abs(temps_w[0:1].astype(jnp.float32))            # (1, K)

    # --- Tile selection: big blocks to amortize ~0.35 us/step, >= 2 steps for v7x ---
    m_pad = -(-M // 256) * 256                  # sublane-friendly padding
    if m_pad >= 2 * tm_max:
        tm = tm_max
        m_pad = -(-m_pad // tm) * tm            # re-pad to a multiple of tm
    elif m_pad >= 512:
        tm = m_pad // 2                         # exactly two grid steps
    else:
        tm = m_pad                              # tiny input: single step
    grid = m_pad // tm

    if m_pad != M:
        y = jnp.pad(y, ((0, m_pad - M), (0, 0)))  # tail rows computed, then dropped

    out = pl.pallas_call(
        rbf_flatten_kernel,
        out_shape=jax.ShapeDtypeStruct((m_pad, K), out_dtype),
        grid_spec=pltpu.PrefetchScalarGridSpec(
            num_scalar_prefetch=0,
            grid=(grid,),
            in_specs=[
                pl.BlockSpec((tm, 1), lambda i: (i, 0)),   # y rows (only narrow input)
                pl.BlockSpec((1, K), lambda i: (0, 0)),    # means row 0
                pl.BlockSpec((1, K), lambda i: (0, 0)),    # -|temps| row 0
            ],
            # NOTE: pipeline_mode=pl.Buffered(3) on the output is an option if a
            # profile ever shows the writeback DMA exposed at large TM.
            out_specs=pl.BlockSpec((tm, K), lambda i: (i, 0)),
        ),
        compiler_params=pltpu.CompilerParams(
            dimension_semantics=("parallel",),
            vmem_limit_bytes=32 * 1024 * 1024,
        ),
    )(y, mean, neg_temp)

    if m_pad != M:
        out = out[:M]
    return out.reshape(B, N1, N2, K)


def reference_rbf_flatten(x, edge_types, t, means_w, temps_w, mul_w, bias_w):
    """Pure-JAX replica of the PyTorch forward for verification."""
    mul = mul_w[edge_types]                       # (B, N, N, 1)
    bias = bias_w[edge_types]                     # (B, N, N, 1)
    y = mul * x[..., None] + bias                 # (B, N, N, 1)
    mean = means_w[jnp.zeros_like(t)]             # (B, 1, 1, K)
    temp = jnp.abs(temps_w[jnp.zeros_like(t)])    # (B, 1, 1, K)
    return jnp.exp(-jnp.square(y - mean) * temp).astype(means_w.dtype)


if __name__ == "__main__":
    # Module hyper-parameters.
    num_diffusion_timesteps = 16
    K = 128
    edge_types_vocab = 1024

    # Deterministic parameter init mirroring nn.init in __init__.
    kp = jax.random.PRNGKey(0)
    k_means, k_temps, k_x, k_et, k_t = jax.random.split(kp, 5)
    means_w = jax.random.uniform(k_means, (num_diffusion_timesteps, K),
                                 jnp.float32, minval=0.0, maxval=3.0)
    temps_w = jax.random.uniform(k_temps, (num_diffusion_timesteps, K),
                                 jnp.float32, minval=0.1, maxval=10.0)
    mul_w = jnp.ones((edge_types_vocab, 1), jnp.float32)    # constant_(1)
    bias_w = jnp.zeros((edge_types_vocab, 1), jnp.float32)  # constant_(0)

    # Small example inputs: batch=2, 16x16 pairwise distance matrix.
    B, N = 2, 16
    x = jax.random.uniform(k_x, (B, N, N), jnp.float32, minval=0.0, maxval=5.0)
    edge_types = jax.random.randint(k_et, (B, N, N), 0, edge_types_vocab,
                                    dtype=jnp.int32)
    t = jax.random.randint(k_t, (B, 1, 1), 0, num_diffusion_timesteps,
                           dtype=jnp.int32)

    out = rbf_flatten(x, edge_types, t, means_w, temps_w, mul_w, bias_w)
    out = jax.block_until_ready(out)

    ref = reference_rbf_flatten(x, edge_types, t, means_w, temps_w, mul_w, bias_w)
    assert out.shape == (B, N, N, K) and out.dtype == means_w.dtype
    assert jnp.allclose(out, ref, atol=1e-5, rtol=1e-5), "mismatch vs reference"

    print("KERNEL_OK")
</pallas_src>

<mosaic_0001>
module attributes {stable_mosaic.version = 11 : i64} {
  func.func @rbf_flatten_kernel(%arg0: i32, %arg1: memref<256x1xf32, #tpu.memory_space<vmem>>, %arg2: memref<1x128xf32, #tpu.memory_space<vmem>>, %arg3: memref<1x128xf32, #tpu.memory_space<vmem>>, %arg4: memref<256x128xf32, #tpu.memory_space<vmem>>) attributes {dimension_semantics = [#tpu.dimension_semantics<parallel>], iteration_bounds = array<i64: 2>, scalar_prefetch = 0 : i64, scratch_operands = 0 : i64, tpu.core_type = #tpu.core_type<tc>, window_params = [{transform_indices = @transform_0, window_bounds = array<i64: 256, 1>}, {pipeline_mode = #tpu.pipeline_mode<synchronous>, transform_indices = @transform_1, window_bounds = array<i64: 1, 128>}, {pipeline_mode = #tpu.pipeline_mode<synchronous>, transform_indices = @transform_2, window_bounds = array<i64: 1, 128>}, {transform_indices = @transform_3, window_bounds = array<i64: 256, 128>}]} {
    %c0 = arith.constant 0 : index
    %c0_0 = arith.constant 0 : index
    %0 = vector.load %arg1[%c0, %c0_0] : memref<256x1xf32, #tpu.memory_space<vmem>>, vector<256x1xf32>
    %c0_1 = arith.constant 0 : index
    %c0_2 = arith.constant 0 : index
    %1 = vector.load %arg2[%c0_1, %c0_2] : memref<1x128xf32, #tpu.memory_space<vmem>>, vector<1x128xf32>
    %2 = vector.broadcast %0 : vector<256x1xf32> to vector<256x128xf32>
    %3 = vector.broadcast %1 : vector<1x128xf32> to vector<256x128xf32>
    %4 = arith.subf %2, %3 : vector<256x128xf32>
    %5 = arith.mulf %4, %4 : vector<256x128xf32>
    %c0_3 = arith.constant 0 : index
    %c0_4 = arith.constant 0 : index
    %6 = vector.load %arg3[%c0_3, %c0_4] : memref<1x128xf32, #tpu.memory_space<vmem>>, vector<1x128xf32>
    %7 = vector.broadcast %6 : vector<1x128xf32> to vector<256x128xf32>
    %8 = arith.mulf %5, %7 : vector<256x128xf32>
    %9 = math.exp %8 : vector<256x128xf32>
    %c0_5 = arith.constant 0 : index
    %c0_6 = arith.constant 0 : index
    %10 = vector.load %arg4[%c0_5, %c0_6] : memref<256x128xf32, #tpu.memory_space<vmem>>, vector<256x128xf32>
    tpu.vector_store %arg4[%c0_5, %c0_6], %9 {strides = array<i32>} : memref<256x128xf32, #tpu.memory_space<vmem>>, vector<256x128xf32>,
    return
  }
  func.func @transform_0(%arg0: i32) -> (i32, i32) {
    %c0_i32 = arith.constant 0 : i32
    %c0_i32_0 = arith.constant 0 : i32
    return %arg0, %c0_i32 : i32, i32
  }
  func.func @transform_1(%arg0: i32) -> (i32, i32) {
    %c0_i32 = arith.constant 0 : i32
    %c0_i32_0 = arith.constant 0 : i32
    %c0_i32_1 = arith.constant 0 : i32
    return %c0_i32, %c0_i32_0 : i32, i32
  }
  func.func @transform_2(%arg0: i32) -> (i32, i32) {
    %c0_i32 = arith.constant 0 : i32
    %c0_i32_0 = arith.constant 0 : i32
    %c0_i32_1 = arith.constant 0 : i32
    return %c0_i32, %c0_i32_0 : i32, i32
  }
  func.func @transform_3(%arg0: i32) -> (i32, i32) {
    %c0_i32 = arith.constant 0 : i32
    %c0_i32_0 = arith.constant 0 : i32
    return %arg0, %c0_i32 : i32, i32
  }
}

</mosaic_0001>

<llo_original>
// kernel: mul.0
$region0: #{mul.0}
  #allocation0 [shape = 's32[1]{0}', space=sflag, size = 0x4, scoped, tag = 'scoped memory for mul.0']
  %s0 = inlined_call_operand.vmem [shape: f32[512,1], index: 0, kind: input, shape index: {}]
  %s1 = inlined_call_operand.vmem [shape: f32[512,1], index: 1, kind: input, shape index: {}]
  %s2 = inlined_call_operand.vmem [shape: f32[512,1], index: 2, kind: output, shape index: {}]
  %v3 = vld [vmem:[%s0] sm:$0x1]
  %v4 = vld [vmem:[%s1] sm:$0x1]
  %5 = xla_tuple %v3, %v4
  %6 = xla_tuple %5
  %v7 = vmul.f32 %v3, %v4
  %8 = xla_tuple %v7
  %9 = vst [vmem:[%s2] sm:$0x1] %v7
  %s10 = scalar_lea.vmem %s0, 1
  %v11 = vld [vmem:[%s10] sm:$0x1]
  %s12 = scalar_lea.vmem %s1, 1
  %v13 = vld [vmem:[%s12] sm:$0x1]
  %14 = xla_tuple %v11, %v13
  %15 = xla_tuple %14
  %v16 = vmul.f32 %v11, %v13
  %17 = xla_tuple %v16
  %s18 = scalar_lea.vmem %s2, 1
  %19 = vst [vmem:[%s18] sm:$0x1] %v16
  %s20 = scalar_lea.vmem %s0, 2
  %v21 = vld [vmem:[%s20] sm:$0x1]
  %s22 = scalar_lea.vmem %s1, 2
  %v23 = vld [vmem:[%s22] sm:$0x1]
  %24 = xla_tuple %v21, %v23
  %25 = xla_tuple %24
  %v26 = vmul.f32 %v21, %v23
  %27 = xla_tuple %v26
  %s28 = scalar_lea.vmem %s2, 2
  %29 = vst [vmem:[%s28] sm:$0x1] %v26
  %s30 = scalar_lea.vmem %s0, 3
  %v31 = vld [vmem:[%s30] sm:$0x1]
  %s32 = scalar_lea.vmem %s1, 3
  %v33 = vld [vmem:[%s32] sm:$0x1]
  %34 = xla_tuple %v31, %v33
  %35 = xla_tuple %34
  %v36 = vmul.f32 %v31, %v33
  %37 = xla_tuple %v36
  %s38 = scalar_lea.vmem %s2, 3
  %39 = vst [vmem:[%s38] sm:$0x1] %v36

// kernel: rbf_flatten.1
$region0: #{rbf_flatten.1}
  #allocation0 [shape = 'u32[]', space=smem, size = 0x4, offset = 0x4, fixed_abs, tag = 'smem constant byte address 0x4 - core index']
  #allocation1 [shape = 'u32[72,128]{1,0:T(1,128)}', space=vmem, size = 0x9000, scoped, tag = 'internal scratch']
  %s0 = inlined_call_operand.vmem [shape: f32[512,1], index: 0, kind: input, shape index: {}]
  %s1 = inlined_call_operand.vmem [shape: f32[1,128], index: 1, kind: input, shape index: {}]
  %s2 = inlined_call_operand.vmem [shape: f32[1,128], index: 2, kind: input, shape index: {}]
  %s3 = inlined_call_operand.hbm [shape: f32[512,128], index: 3, kind: output, shape index: {}]
  %s4 = sld [smem:[#allocation0]]
  $region45: #{rbf_flatten.1} parent=0
    _
  %s6 = ssub.s32 1, %s4
  %s7 = scalar_select 0, %s6, %s4
  $region1: #{rbf_flatten.1} parent=0
    #allocation2 [shape = 'u8[262144]{0}', space=vmem, size = 0x40000, scoped, tag = 'output window, operand 0']
    #allocation3 [shape = 's32[2]{0}', space=sflag, size = 0x8, scoped, tag = 'scoped memory for rbf_flatten.1']
    %8 = vsyncpa [#allocation3], 0
    %s9 = scalar_lea.sflag [#allocation3], 1
    %10 = vsyncpa %s9, 0
    loop: start=0, step=1, limit=4
    $region2: #{rbf_flatten.1} parent=1 // loop_pre_header
      _
    $region3: #{rbf_flatten.1} parent=1 // loop_header
      %s12 = sphi 0, %s16
      %p13 = scmp.ge.s32.totalorder %s12, 4
      %s22 = sphi 0, %s24
      %s25 = sphi 0, %s22
      %s26 = sphi 0, %s25
      %s42 = sphi 0, %s26
      %s46 = sphi 0, %s46
      %s48 = sphi 0, %s46
      %s49 = sphi 0, %s48
      %s63 = sphi 0, %s49
      %s67 = sphi 0, %s67
      %s69 = sphi 0, %s67
      %s70 = sphi 0, %s69
      %s84 = sphi 0, %s70
      %s90 = sphi 0, %s92
      %s93 = sphi 0, %s90
      %s94 = sphi 0, %s93
      %s110 = sphi 0, %s94
    $region4: #{rbf_flatten.1} parent=1 // loop_header_branch
      %15 = sbr.rel (%p13) target = $region8
    $region5: #{rbf_flatten.1} parent=1 // loop_body
      %s17 = ssub.s32 %s12, 1
      %s18 = ssub.s32 %s12, 2
      %s19 = sadd.s32 %s12, 1
      %s20 = ssub.s32 %s12, %s19
      %p21 = scmp.eq.s32.totalorder %s20, 0
      %s23 = sadd.s32 %s22, 1
      %s24 = scalar_select %p21, %s22, %s23
      %p27 = pneg %p21
      %p28 = scmp.eq.s32.totalorder %s12, 1
      %p29 = por %p27, %p28
      %p30 = scmp.ne.s32.totalorder %s22, %s25
      %p31 = scmp.eq.s32.totalorder %s12, 0
      %p32 = por %p30, %p31
      %p33 = scmp.ne.s32.totalorder %s22, %s25
      %p34 = scmp.eq.s32.totalorder %s17, 1
      %p35 = por %p33, %p34
      %p36 = scmp.ne.s32.totalorder %s25, %s26
      %p37 = scmp.eq.s32.totalorder %s17, 0
      %p38 = por %p36, %p37
      %p39 = scmp.ne.s32.totalorder %s25, %s26
      %p40 = scmp.eq.s32.totalorder %s18, 1
      %p41 = por %p39, %p40
      %p43 = scmp.ne.s32.totalorder %s26, %s42
      %p44 = scmp.eq.s32.totalorder %s18, 0
      %p45 = por %p43, %p44
      %s47 = sadd.s32 %s46, 1
      %p50 = scmp.eq.s32.totalorder %s12, 1
      %p51 = scmp.ne.s32.totalorder %s46, %s48
      %p52 = scmp.eq.s32.totalorder %s12, 0
      %p53 = por %p51, %p52
      %p54 = scmp.ne.s32.totalorder %s46, %s48
      %p55 = scmp.eq.s32.totalorder %s17, 1
      %p56 = por %p54, %p55
      %p57 = scmp.ne.s32.totalorder %s48, %s49
      %p58 = scmp.eq.s32.totalorder %s17, 0
      %p59 = por %p57, %p58
      %p60 = scmp.ne.s32.totalorder %s48, %s49
      %p61 = scmp.eq.s32.totalorder %s18, 1
      %p62 = por %p60, %p61
      %p64 = scmp.ne.s32.totalorder %s49, %s63
      %p65 = scmp.eq.s32.totalorder %s18, 0
      %p66 = por %p64, %p65
      %s68 = sadd.s32 %s67, 1
      %p71 = scmp.eq.s32.totalorder %s12, 1
      %p72 = scmp.ne.s32.totalorder %s67, %s69
      %p73 = scmp.eq.s32.totalorder %s12, 0
      %p74 = por %p72, %p73
      %p75 = scmp.ne.s32.totalorder %s67, %s69
      %p76 = scmp.eq.s32.totalorder %s17, 1
      %p77 = por %p75, %p76
      %p78 = scmp.ne.s32.totalorder %s69, %s70
      %p79 = scmp.eq.s32.totalorder %s17, 0
      %p80 = por %p78, %p79
      %p81 = scmp.ne.s32.totalorder %s69, %s70
      %p82 = scmp.eq.s32.totalorder %s18, 1
      %p83 = por %p81, %p82
      %p85 = scmp.ne.s32.totalorder %s70, %s84
      %p86 = scmp.eq.s32.totalorder %s18, 0
      %p87 = por %p85, %p86
      %s88 = ssub.s32 %s12, %s19
      %p89 = scmp.eq.s32.totalorder %s88, 0
      %s91 = sadd.s32 %s90, 1
      %s92 = scalar_select %p89, %s90, %s91
      %p95 = pneg %p89
      %p96 = scmp.eq.s32.totalorder %s12, 1
      %p97 = por %p95, %p96
      %p98 = scmp.ne.s32.totalorder %s90, %s93
      %p99 = scmp.eq.s32.totalorder %s12, 0
      %p100 = por %p98, %p99
      %p101 = scmp.ne.s32.totalorder %s90, %s93
      %p102 = scmp.eq.s32.totalorder %s17, 1
      %p103 = por %p101, %p102
      %p104 = scmp.ne.s32.totalorder %s93, %s94
      %p105 = scmp.eq.s32.totalorder %s17, 0
      %p106 = por %p104, %p105
      %p107 = scmp.ne.s32.totalorder %s93, %s94
      %p108 = scmp.eq.s32.totalorder %s18, 1
      %p109 = por %p107, %p108
      %p111 = scmp.ne.s32.totalorder %s94, %s110
      %p112 = scmp.eq.s32.totalorder %s18, 0
      %p113 = por %p111, %p112
      %p114 = scmp.le.s32.totalorder 1, %s12
      %p115 = scmp.lt.s32.totalorder %s12, 3
      %p116 = pnand %p114, %p115
      %p117 = pneg %p116
      // Predicated region
      $region9: #{rbf_flatten.1} parent=5 // pred_check
        _
      $region10: #{rbf_flatten.1} parent=5 // pred_check_branch
        %119 = sbr.rel (%p116) target = $region12
      $region11: #{rbf_flatten.1} parent=5 // pred_region
        %s120 = ssub.s32 %s12, 1
        // Predicated region
        $region13: #{rbf_flatten.1} parent=11 // pred_check
          %p121 = pneg %p59
        $region14: #{rbf_flatten.1} parent=11 // pred_check_branch
          %123 = sbr.rel (%p121) target = $region16
        $region15: #{rbf_flatten.1} parent=11 // pred_region
          _
        $region16: #{rbf_flatten.1} parent=11 // pred_fallthru
          _
        // Predicated region
        $region17: #{rbf_flatten.1} parent=11 // pred_check
          %p124 = pneg %p80
        $region18: #{rbf_flatten.1} parent=11 // pred_check_branch
          %126 = sbr.rel (%p124) target = $region20
        $region19: #{rbf_flatten.1} parent=11 // pred_region
          _
        $region20: #{rbf_flatten.1} parent=11 // pred_fallthru
          _
      $region12: #{rbf_flatten.1} parent=5 // pred_fallthru
        _
      %p127 = scmp.lt.s32.totalorder %s12, 2
      // Predicated region
      $region21: #{rbf_flatten.1} parent=5 // pred_check
        %p128 = pneg %p127
      $region22: #{rbf_flatten.1} parent=5 // pred_check_branch
        %130 = sbr.rel (%p128) target = $region24
      $region23: #{rbf_flatten.1} parent=5 // pred_region
        // Predicated region
        $region25: #{rbf_flatten.1} parent=23 // pred_check
          %p131 = pneg %p32
        $region26: #{rbf_flatten.1} parent=23 // pred_check_branch
          %133 = sbr.rel (%p131) target = $region28
        $region27: #{rbf_flatten.1} parent=23 // pred_region
          %s134 = smul.u32 32, %s12
          %p135 = scmp.lt.s32.totalorder %s134, 63
          %s136 = scalar_select %p135, %s134, 63
          %s137 = smul.addr %s136, 8
          %s138 = scalar_lea.vmem %s0, %s137
          %s139 = smul.u32 32, %s12
        $region28: #{rbf_flatten.1} parent=23 // pred_fallthru
          _
      $region24: #{rbf_flatten.1} parent=5 // pred_fallthru
        _
      %p140 = scmp.le.s32.totalorder 1, %s12
      %p141 = scmp.lt.s32.totalorder %s12, 3
      %p142 = pnand %p140, %p141
      %p143 = pneg %p142
      // Predicated region
      $region29: #{rbf_flatten.1} parent=5 // pred_check
        _
      $region30: #{rbf_flatten.1} parent=5 // pred_check_branch
        %145 = sbr.rel (%p142) target = $region32
      $region31: #{rbf_flatten.1} parent=5 // pred_region
        %s146 = ssub.s32 %s12, 1
        %s147 = smul.u32 32, %s17
        %p148 = scmp.lt.s32.totalorder %s147, 63
        %s149 = scalar_select %p148, %s147, 63
        %s150 = smul.addr %s149, 8
        %s151 = scalar_lea.vmem %s0, %s150
        %p152 = pneg %p38
        %p153 = pneg %p35
        %p154 = pneg %p59
        %p155 = pneg %p56
        %p156 = pneg %p80
        %p157 = pneg %p77
        %p158 = pneg %p106
        %p159 = pneg %p103
        %s160 = sand.u32 %s93, 1
        %s161 = scalar_lea.sflag [#allocation3], %s160
        %s162 = sand.u32 %s93, 1
        %s163 = smul.addr %s162, 256
        %s164 = scalar_lea.vmem [#allocation2], %s163
        %s165 = smul.u32 32, %s17
        %p166 = scmp.lt.s32.totalorder %s165, 63
        %s167 = scalar_select %p166, %s165, 63
        %s168 = smul.addr %s167, 8
        %s169 = scalar_lea.vmem %s0, %s168
        %s170 = smul.u32 32, %s17
        %s171 = smul.u32 32, %s17
        %v172 = vld [vmem:[%s169] sm:$0xff]
        %v173 = vld [vmem:[%s169 + $0x8] sm:$0xff]
        %v174 = vld [vmem:[%s169 + $0x10] sm:$0xff]
        %v175 = vld [vmem:[%s169 + $0x18] sm:$0xff]
        %v176 = vld [vmem:[%s169 + $0x20] sm:$0xff]
        %v177 = vld [vmem:[%s169 + $0x28] sm:$0xff]
        %v178 = vld [vmem:[%s169 + $0x30] sm:$0xff]
        %v179 = vld [vmem:[%s169 + $0x38] sm:$0xff]
        %v180 = vld [vmem:[%s169 + $0x40] sm:$0xff]
        %v181 = vld [vmem:[%s169 + $0x48] sm:$0xff]
        %v182 = vld [vmem:[%s169 + $0x50] sm:$0xff]
        %v183 = vld [vmem:[%s169 + $0x58] sm:$0xff]
        %v184 = vld [vmem:[%s169 + $0x60] sm:$0xff]
        %v185 = vld [vmem:[%s169 + $0x68] sm:$0xff]
        %v186 = vld [vmem:[%s169 + $0x70] sm:$0xff]
        %v187 = vld [vmem:[%s169 + $0x78] sm:$0xff]
        %v188 = vld [vmem:[%s169 + $0x80] sm:$0xff]
        %v189 = vld [vmem:[%s169 + $0x88] sm:$0xff]
        %v190 = vld [vmem:[%s169 + $0x90] sm:$0xff]
        %v191 = vld [vmem:[%s169 + $0x98] sm:$0xff]
        %v192 = vld [vmem:[%s169 + $0xa0] sm:$0xff]
        %v193 = vld [vmem:[%s169 + $0xa8] sm:$0xff]
        %v194 = vld [vmem:[%s169 + $0xb0] sm:$0xff]
        %v195 = vld [vmem:[%s169 + $0xb8] sm:$0xff]
        %v196 = vld [vmem:[%s169 + $0xc0] sm:$0xff]
        %v197 = vld [vmem:[%s169 + $0xc8] sm:$0xff]
        %v198 = vld [vmem:[%s169 + $0xd0] sm:$0xff]
        %v199 = vld [vmem:[%s169 + $0xd8] sm:$0xff]
        %v200 = vld [vmem:[%s169 + $0xe0] sm:$0xff]
        %v201 = vld [vmem:[%s169 + $0xe8] sm:$0xff]
        %v202 = vld [vmem:[%s169 + $0xf0] sm:$0xff]
        %v203 = vld [vmem:[%s169 + $0xf8] sm:$0xff]
        %v204 = vld [vmem:[%s1] sm:$0x1]
        %206 = vset.pattern.permute.xlu0 0
        %207 = vperm.xlu0 %206, %v172
        %v208 = vpop.permute.xlu0 %207
        %211 = vset.pattern.permute.xlu0 0
        %212 = vperm.xlu0 %211, %v173
        %v213 = vpop.permute.xlu0 %212
        %216 = vset.pattern.permute.xlu0 0
        %217 = vperm.xlu0 %216, %v174
        %v218 = vpop.permute.xlu0 %217
        %221 = vset.pattern.permute.xlu0 0
        %222 = vperm.xlu0 %221, %v175
        %v223 = vpop.permute.xlu0 %222
        %226 = vset.pattern.permute.xlu0 0
        %227 = vperm.xlu0 %226, %v176
        %v228 = vpop.permute.xlu0 %227
        %231 = vset.pattern.permute.xlu0 0
        %232 = vperm.xlu0 %231, %v177
        %v233 = vpop.permute.xlu0 %232
        %236 = vset.pattern.permute.xlu0 0
        %237 = vperm.xlu0 %236, %v178
        %v238 = vpop.permute.xlu0 %237
        %241 = vset.pattern.permute.xlu0 0
        %242 = vperm.xlu0 %241, %v179
        %v243 = vpop.permute.xlu0 %242
        %246 = vset.pattern.permute.xlu0 0
        %247 = vperm.xlu0 %246, %v180
        %v248 = vpop.permute.xlu0 %247
        %251 = vset.pattern.permute.xlu0 0
        %252 = vperm.xlu0 %251, %v181
        %v253 = vpop.permute.xlu0 %252
        %256 = vset.pattern.permute.xlu0 0
        %257 = vperm.xlu0 %256, %v182
        %v258 = vpop.permute.xlu0 %257
        %261 = vset.pattern.permute.xlu0 0
        %262 = vperm.xlu0 %261, %v183
        %v263 = vpop.permute.xlu0 %262
        %266 = vset.pattern.permute.xlu0 0
        %267 = vperm.xlu0 %266, %v184
        %v268 = vpop.permute.xlu0 %267
        %271 = vset.pattern.permute.xlu0 0
        %272 = vperm.xlu0 %271, %v185
        %v273 = vpop.permute.xlu0 %272
        %276 = vset.pattern.permute.xlu0 0
        %277 = vperm.xlu0 %276, %v186
        %v278 = vpop.permute.xlu0 %277
        %281 = vset.pattern.permute.xlu0 0
        %282 = vperm.xlu0 %281, %v187
        %v283 = vpop.permute.xlu0 %282
        %286 = vset.pattern.permute.xlu0 0
        %287 = vperm.xlu0 %286, %v188
        %v288 = vpop.permute.xlu0 %287
        %291 = vset.pattern.permute.xlu0 0
        %292 = vperm.xlu0 %291, %v189
        %v293 = vpop.permute.xlu0 %292
        %296 = vset.pattern.permute.xlu0 0
        %297 = vperm.xlu0 %296, %v190
        %v298 = vpop.permute.xlu0 %297
        %301 = vset.pattern.permute.xlu0 0
        %302 = vperm.xlu0 %301, %v191
        %v303 = vpop.permute.xlu0 %302
        %306 = vset.pattern.permute.xlu0 0
        %307 = vperm.xlu0 %306, %v192
        %v308 = vpop.permute.xlu0 %307
        %311 = vset.pattern.permute.xlu0 0
        %312 = vperm.xlu0 %311, %v193
        %v313 = vpop.permute.xlu0 %312
        %316 = vset.pattern.permute.xlu0 0
        %317 = vperm.xlu0 %316, %v194
        %v318 = vpop.permute.xlu0 %317
        %321 = vset.pattern.permute.xlu0 0
        %322 = vperm.xlu0 %321, %v195
        %v323 = vpop.permute.xlu0 %322
        %326 = vset.pattern.permute.xlu0 0
        %327 = vperm.xlu0 %326, %v196
        %v328 = vpop.permute.xlu0 %327
        %331 = vset.pattern.permute.xlu0 0
        %332 = vperm.xlu0 %331, %v197
        %v333 = vpop.permute.xlu0 %332
        %336 = vset.pattern.permute.xlu0 0
        %337 = vperm.xlu0 %336, %v198
        %v338 = vpop.permute.xlu0 %337
        %341 = vset.pattern.permute.xlu0 0
        %342 = vperm.xlu0 %341, %v199
        %v343 = vpop.permute.xlu0 %342
        %346 = vset.pattern.permute.xlu0 0
        %347 = vperm.xlu0 %346, %v200
        %v348 = vpop.permute.xlu0 %347
        %351 = vset.pattern.permute.xlu0 0
        %352 = vperm.xlu0 %351, %v201
        %v353 = vpop.permute.xlu0 %352
        %356 = vset.pattern.permute.xlu0 0
        %357 = vperm.xlu0 %356, %v202
        %v358 = vpop.permute.xlu0 %357
        %361 = vset.pattern.permute.xlu0 0
        %362 = vperm.xlu0 %361, %v203
        %v363 = vpop.permute.xlu0 %362
        %v366 = vperm.slane %v204, 0
        %v368 = vsub.f32 %v208, %v366
        %v369 = vsub.f32 %v213, %v366
        %v370 = vsub.f32 %v218, %v366
        %v371 = vsub.f32 %v223, %v366
        %v372 = vsub.f32 %v228, %v366
        %v373 = vsub.f32 %v233, %v366
        %v374 = vsub.f32 %v238, %v366
        %v375 = vsub.f32 %v243, %v366
        %v376 = vsub.f32 %v248, %v366
        %v377 = vsub.f32 %v253, %v366
        %v378 = vsub.f32 %v258, %v366
        %v379 = vsub.f32 %v263, %v366
        %v380 = vsub.f32 %v268, %v366
        %v381 = vsub.f32 %v273, %v366
        %v382 = vsub.f32 %v278, %v366
        %v383 = vsub.f32 %v283, %v366
        %v384 = vsub.f32 %v288, %v366
        %v385 = vsub.f32 %v293, %v366
        %v386 = vsub.f32 %v298, %v366
        %v387 = vsub.f32 %v303, %v366
        %v388 = vsub.f32 %v308, %v366
        %v389 = vsub.f32 %v313, %v366
        %v390 = vsub.f32 %v318, %v366
        %v391 = vsub.f32 %v323, %v366
        %v392 = vsub.f32 %v328, %v366
        %v393 = vsub.f32 %v333, %v366
        %v394 = vsub.f32 %v338, %v366
        %v395 = vsub.f32 %v343, %v366
        %v396 = vsub.f32 %v348, %v366
        %v397 = vsub.f32 %v353, %v366
        %v398 = vsub.f32 %v358, %v366
        %v399 = vsub.f32 %v363, %v366
        %v400 = vmul.f32 %v368, %v368
        %v401 = vmul.f32 %v369, %v369
        %v402 = vmul.f32 %v370, %v370
        %v403 = vmul.f32 %v371, %v371
        %v404 = vmul.f32 %v372, %v372
        %v405 = vmul.f32 %v373, %v373
        %v406 = vmul.f32 %v374, %v374
        %v407 = vmul.f32 %v375, %v375
        %v408 = vmul.f32 %v376, %v376
        %v409 = vmul.f32 %v377, %v377
        %v410 = vmul.f32 %v378, %v378
        %v411 = vmul.f32 %v379, %v379
        %v412 = vmul.f32 %v380, %v380
        %v413 = vmul.f32 %v381, %v381
        %v414 = vmul.f32 %v382, %v382
        %v415 = vmul.f32 %v383, %v383
        %v416 = vmul.f32 %v384, %v384
        %v417 = vmul.f32 %v385, %v385
        %v418 = vmul.f32 %v386, %v386
        %v419 = vmul.f32 %v387, %v387
        %v420 = vmul.f32 %v388, %v388
        %v421 = vmul.f32 %v389, %v389
        %v422 = vmul.f32 %v390, %v390
        %v423 = vmul.f32 %v391, %v391
        %v424 = vmul.f32 %v392, %v392
        %v425 = vmul.f32 %v393, %v393
        %v426 = vmul.f32 %v394, %v394
        %v427 = vmul.f32 %v395, %v395
        %v428 = vmul.f32 %v396, %v396
        %v429 = vmul.f32 %v397, %v397
        %v430 = vmul.f32 %v398, %v398
        %v431 = vmul.f32 %v399, %v399
        %v432 = vld [vmem:[%s2] sm:$0x1]
        %v434 = vperm.slane %v432, 0
        %v436 = vmul.f32 %v400, %v434
        %v437 = vmul.f32 %v401, %v434
        %v438 = vmul.f32 %v402, %v434
        %v439 = vmul.f32 %v403, %v434
        %v440 = vmul.f32 %v404, %v434
        %v441 = vmul.f32 %v405, %v434
        %v442 = vmul.f32 %v406, %v434
        %v443 = vmul.f32 %v407, %v434
        %v444 = vmul.f32 %v408, %v434
        %v445 = vmul.f32 %v409, %v434
        %v446 = vmul.f32 %v410, %v434
        %v447 = vmul.f32 %v411, %v434
        %v448 = vmul.f32 %v412, %v434
        %v449 = vmul.f32 %v413, %v434
        %v450 = vmul.f32 %v414, %v434
        %v451 = vmul.f32 %v415, %v434
        %v452 = vmul.f32 %v416, %v434
        %v453 = vmul.f32 %v417, %v434
        %v454 = vmul.f32 %v418, %v434
        %v455 = vmul.f32 %v419, %v434
        %v456 = vmul.f32 %v420, %v434
        %v457 = vmul.f32 %v421, %v434
        %v458 = vmul.f32 %v422, %v434
        %v459 = vmul.f32 %v423, %v434
        %v460 = vmul.f32 %v424, %v434
        %v461 = vmul.f32 %v425, %v434
        %v462 = vmul.f32 %v426, %v434
        %v463 = vmul.f32 %v427, %v434
        %v464 = vmul.f32 %v428, %v434
        %v465 = vmul.f32 %v429, %v434
        %v466 = vmul.f32 %v430, %v434
        %v467 = vmul.f32 %v431, %v434
        %v468 = vmul.f32 %v436, 1.442695
        %v469 = vpow.pop %v468
        %v470 = vmul.f32 %v437, 1.442695
        %v471 = vpow.pop %v470
        %v472 = vmul.f32 %v438, 1.442695
        %v473 = vpow.pop %v472
        %v474 = vmul.f32 %v439, 1.442695
        %v475 = vpow.pop %v474
        %v476 = vmul.f32 %v440, 1.442695
        %v477 = vpow.pop %v476
        %v478 = vmul.f32 %v441, 1.442695
        %v479 = vpow.pop %v478
        %v480 = vmul.f32 %v442, 1.442695
        %v481 = vpow.pop %v480
        %v482 = vmul.f32 %v443, 1.442695
        %v483 = vpow.pop %v482
        %v484 = vmul.f32 %v444, 1.442695
        %v485 = vpow.pop %v484
        %v486 = vmul.f32 %v445, 1.442695
        %v487 = vpow.pop %v486
        %v488 = vmul.f32 %v446, 1.442695
        %v489 = vpow.pop %v488
        %v490 = vmul.f32 %v447, 1.442695
        %v491 = vpow.pop %v490
        %v492 = vmul.f32 %v448, 1.442695
        %v493 = vpow.pop %v492
        %v494 = vmul.f32 %v449, 1.442695
        %v495 = vpow.pop %v494
        %v496 = vmul.f32 %v450, 1.442695
        %v497 = vpow.pop %v496
        %v498 = vmul.f32 %v451, 1.442695
        %v499 = vpow.pop %v498
        %v500 = vmul.f32 %v452, 1.442695
        %v501 = vpow.pop %v500
        %v502 = vmul.f32 %v453, 1.442695
        %v503 = vpow.pop %v502
        %v504 = vmul.f32 %v454, 1.442695
        %v505 = vpow.pop %v504
        %v506 = vmul.f32 %v455, 1.442695
        %v507 = vpow.pop %v506
        %v508 = vmul.f32 %v456, 1.442695
        %v509 = vpow.pop %v508
        %v510 = vmul.f32 %v457, 1.442695
        %v511 = vpow.pop %v510
        %v512 = vmul.f32 %v458, 1.442695
        %v513 = vpow.pop %v512
        %v514 = vmul.f32 %v459, 1.442695
        %v515 = vpow.pop %v514
        %v516 = vmul.f32 %v460, 1.442695
        %v517 = vpow.pop %v516
        %v518 = vmul.f32 %v461, 1.442695
        %v519 = vpow.pop %v518
        %v520 = vmul.f32 %v462, 1.442695
        %v521 = vpow.pop %v520
        %v522 = vmul.f32 %v463, 1.442695
        %v523 = vpow.pop %v522
        %v524 = vmul.f32 %v464, 1.442695
        %v525 = vpow.pop %v524
        %v526 = vmul.f32 %v465, 1.442695
        %v527 = vpow.pop %v526
        %v528 = vmul.f32 %v466, 1.442695
        %v529 = vpow.pop %v528
        %v530 = vmul.f32 %v467, 1.442695
        %v531 = vpow.pop %v530
        %532 = vst [vmem:[%s164] sm:$0xff] %v469
        %533 = vst [vmem:[%s164 + $0x8] sm:$0xff] %v471
        %534 = vst [vmem:[%s164 + $0x10] sm:$0xff] %v473
        %535 = vst [vmem:[%s164 + $0x18] sm:$0xff] %v475
        %536 = vst [vmem:[%s164 + $0x20] sm:$0xff] %v477
        %537 = vst [vmem:[%s164 + $0x28] sm:$0xff] %v479
        %538 = vst [vmem:[%s164 + $0x30] sm:$0xff] %v481
        %539 = vst [vmem:[%s164 + $0x38] sm:$0xff] %v483
        %540 = vst [vmem:[%s164 + $0x40] sm:$0xff] %v485
        %541 = vst [vmem:[%s164 + $0x48] sm:$0xff] %v487
        %542 = vst [vmem:[%s164 + $0x50] sm:$0xff] %v489
        %543 = vst [vmem:[%s164 + $0x58] sm:$0xff] %v491
        %544 = vst [vmem:[%s164 + $0x60] sm:$0xff] %v493
        %545 = vst [vmem:[%s164 + $0x68] sm:$0xff] %v495
        %546 = vst [vmem:[%s164 + $0x70] sm:$0xff] %v497
        %547 = vst [vmem:[%s164 + $0x78] sm:$0xff] %v499
        %548 = vst [vmem:[%s164 + $0x80] sm:$0xff] %v501
        %549 = vst [vmem:[%s164 + $0x88] sm:$0xff] %v503
        %550 = vst [vmem:[%s164 + $0x90] sm:$0xff] %v505
        %551 = vst [vmem:[%s164 + $0x98] sm:$0xff] %v507
        %552 = vst [vmem:[%s164 + $0xa0] sm:$0xff] %v509
        %553 = vst [vmem:[%s164 + $0xa8] sm:$0xff] %v511
        %554 = vst [vmem:[%s164 + $0xb0] sm:$0xff] %v513
        %555 = vst [vmem:[%s164 + $0xb8] sm:$0xff] %v515
        %556 = vst [vmem:[%s164 + $0xc0] sm:$0xff] %v517
        %557 = vst [vmem:[%s164 + $0xc8] sm:$0xff] %v519
        %558 = vst [vmem:[%s164 + $0xd0] sm:$0xff] %v521
        %559 = vst [vmem:[%s164 + $0xd8] sm:$0xff] %v523
        %560 = vst [vmem:[%s164 + $0xe0] sm:$0xff] %v525
        %561 = vst [vmem:[%s164 + $0xe8] sm:$0xff] %v527
        %562 = vst [vmem:[%s164 + $0xf0] sm:$0xff] %v529
        %563 = vst [vmem:[%s164 + $0xf8] sm:$0xff] %v531
        %s564 = sand.u32 %s93, 1
        %s565 = scalar_lea.sflag [#allocation3], %s564
        %s566 = sand.u32 %s93, 1
        %s567 = smul.addr %s566, 256
        %s568 = scalar_lea.vmem [#allocation2], %s567
        // Predicated region
        $region33: #{rbf_flatten.1} parent=31 // pred_check
          %p569 = pneg %p103
        $region34: #{rbf_flatten.1} parent=31 // pred_check_branch
          %571 = sbr.rel (%p569) target = $region36
        $region35: #{rbf_flatten.1} parent=31 // pred_region
          %s572 = smul.u32 32, %s17
          %574 = vsyncadd %s565, 0
          %s575 = smul.addr %s572, 8
          %s576 = scalar_lea.hbm %s3, %s575
          %s577 = sshll.u32 %s568, 4
          %s578 = int_to_ptr.vmem [resolvable:$true] %s577
          %s579 = sshll.u32 %s576, 4
          %s580 = int_to_ptr.hbm [resolvable:$true] %s579
          %585 = dma.vmem_to_hbm [thread:$0]  %s578, 4096, %s580, %s565, 128, 128, 8
        $region36: #{rbf_flatten.1} parent=31 // pred_fallthru
          _
      $region32: #{rbf_flatten.1} parent=5 // pred_fallthru
        _
      %p586 = scmp.le.s32.totalorder 2, %s12
      // Predicated region
      $region37: #{rbf_flatten.1} parent=5 // pred_check
        %p587 = pneg %p586
      $region38: #{rbf_flatten.1} parent=5 // pred_check_branch
        %589 = sbr.rel (%p587) target = $region40
      $region39: #{rbf_flatten.1} parent=5 // pred_region
        %s590 = ssub.s32 %s12, 2
        // Predicated region
        $region41: #{rbf_flatten.1} parent=39 // pred_check
          %p591 = pneg %p109
        $region42: #{rbf_flatten.1} parent=39 // pred_check_branch
          %593 = sbr.rel (%p591) target = $region44
        $region43: #{rbf_flatten.1} parent=39 // pred_region
          %s594 = sand.u32 %s94, 1
          %s595 = scalar_lea.sflag [#allocation3], %s594
          %s596 = sand.u32 %s94, 1
          %s597 = smul.addr %s596, 256
          %s598 = scalar_lea.vmem [#allocation2], %s597
          %600 = dma.done %s595, 4096
        $region44: #{rbf_flatten.1} parent=39 // pred_fallthru
          _
      $region40: #{rbf_flatten.1} parent=5 // pred_fallthru
        _
    $region6: #{rbf_flatten.1} parent=1 // loop_footer
      %s16 = sadd.s32 1, %s12
    $region7: #{rbf_flatten.1} parent=1 // loop_footer_branch
      %11 = sbr.rel target = $region3
    $region8: #{rbf_flatten.1} parent=1 // loop_exit
      _
    %601 = vsyncpa [#allocation3], 1
    %s602 = scalar_lea.sflag [#allocation3], 1
    %603 = vsyncpa %s602, 1

</llo_original>
